<compile_context>
chip_gen: v7x
topology: tpu7x:2x2x1
jax: 0.10.0
libtpu: 0.0.40
codegen_flags: <defaults>
</compile_context>

<pallas_src>
import functools

import jax
import jax.numpy as jnp
from jax.experimental import pallas as pl
from jax.experimental.pallas import tpu as pltpu


def _softplus(x):
    # Matches torch.nn.Softplus (beta=1, threshold=20) within fp tolerance.
    return jnp.where(x > 20.0, x, jnp.log1p(jnp.exp(jnp.minimum(x, 20.0))))


def _decode_var_kernel(params_ref, out_ref, *, repeats):
    # params_ref: (2, P) VMEM tile -- row 0 = _macro_var, row 1 = _micro_var (flattened C*X).
    # out_ref:    (Rt, L) output block with L = P * repeats (lane-dense).
    sp = _softplus(params_ref[...].astype(jnp.float32))        # (2, P)
    macro = sp[0:1, :]                                         # (1, P)
    micro = sp[1:2, :]                                         # (1, P)
    # Exact reference semantics: 1/(1/a + 1/b) (0-variance underflow -> 0, not NaN).
    joint = 1.0 / (1.0 / macro + 1.0 / micro)                  # (1, P)
    if repeats == 1:
        row = joint
    else:
        row = jnp.concatenate([joint] * repeats, axis=1)       # (1, L) lane-dense row
    out_ref[...] = jnp.broadcast_to(row, out_ref.shape).astype(out_ref.dtype)


def _choose_packing(B, P, *, max_lane_width, block_budget_bytes):
    """Pick (r, L, R, Rt): r copies of the period-P row per lane row, Rt rows per block."""
    r = 1
    for cand in range(1, B + 1):
        if B % cand == 0 and P * cand <= max_lane_width:
            r = cand
    L = P * r
    R = B // r
    max_rows = max(1, block_budget_bytes // (L * 4))
    if R <= max_rows:
        Rt = R                                   # full extent -> always a legal block dim
    else:
        Rt = min(R, max(8, (max_rows // 8) * 8))  # multiple of 8 sublanes
    return r, L, R, Rt


def decode_var_forward(macro_var_param, micro_var_param, mu, z, *,
                       max_lane_width=2048,
                       block_budget_bytes=6 * 1024 * 1024,
                       small_output_bytes=256 * 1024,
                       force_pallas=False):
    """Pallas implementation of DecodeVarNet.forward(mu, z).

    macro_var_param / micro_var_param : raw (pre-softplus) params, shape = shape_x = (C, X)
    mu : unused (matches the PyTorch forward)
    z  : only its leading (batch) dim is used
    """
    del mu  # unused by the PyTorch forward as well
    C, X = macro_var_param.shape
    B = int(z.shape[0])
    P = C * X

    macro_flat = macro_var_param.reshape(P).astype(jnp.float32)
    micro_flat = micro_var_param.reshape(P).astype(jnp.float32)

    if (not force_pallas) and (B * P * 4 < small_output_bytes):
        # Tiny output: kernel launch + pipeline prologue dominate -> inline path.
        macro = _softplus(macro_flat)
        micro = _softplus(micro_flat)
        joint = 1.0 / (1.0 / macro + 1.0 / micro)
        return jnp.broadcast_to(joint.reshape(1, C, X), (B, C, X))

    # One stacked parameter tensor -> single grid-invariant DMA.
    params = jnp.stack([macro_flat, micro_flat], axis=0)        # (2, P)

    r, L, R, Rt = _choose_packing(
        B, P, max_lane_width=max_lane_width, block_budget_bytes=block_budget_bytes)

    out2d = pl.pallas_call(
        functools.partial(_decode_var_kernel, repeats=r),
        out_shape=jax.ShapeDtypeStruct((R, L), jnp.float32),
        grid_spec=pltpu.PrefetchScalarGridSpec(
            num_scalar_prefetch=0,
            grid=(pl.cdiv(R, Rt),),                              # ragged last block is clamped
            in_specs=[pl.BlockSpec((2, P), lambda b: (0, 0))],   # same params every step
            out_specs=pl.BlockSpec((Rt, L), lambda b: (b, 0)),
        ),
        compiler_params=pltpu.CompilerParams(
            dimension_semantics=("parallel",),   # shards batch blocks across TCs on v7x
        ),
    )(params)

    # (R, L) row-major == (B, C*X) row-major == (B, C, X): free view reshape.
    return out2d.reshape(B, C, X)


def _reference(macro_var_param, micro_var_param, z):
    macro = jax.nn.softplus(macro_var_param)
    micro = jax.nn.softplus(micro_var_param)
    joint = 1.0 / (1.0 / macro + 1.0 / micro)
    return jnp.broadcast_to(joint[None], (z.shape[0],) + joint.shape)


if __name__ == "__main__":
    key = jax.random.PRNGKey(0)
    k1, k2, k3, k4 = jax.random.split(key, 4)

    # Small shapes consistent with the module: shape_x = (C, X) = (4, 16)
    B, C, X = 2, 4, 16
    latent = 8

    macro_var_param = jax.random.normal(k1, (C, X), dtype=jnp.float32)
    micro_var_param = jax.random.normal(k2, (C, X), dtype=jnp.float32)
    mu = jax.random.normal(k3, (B, latent), dtype=jnp.float32)
    z = jax.random.normal(k4, (B, latent), dtype=jnp.float32)

    ref_small = _reference(macro_var_param, micro_var_param, z)

    # 1) Pallas path on the module's toy shape (single lane-dense block: r=2 -> L=128).
    out = jax.block_until_ready(
        decode_var_forward(macro_var_param, micro_var_param, mu, z, force_pallas=True))
    assert out.shape == (B, C, X), out.shape
    assert jnp.allclose(out, ref_small, atol=1e-5, rtol=1e-5), \
        float(jnp.max(jnp.abs(out - ref_small)))

    # 2) Default path: tiny output takes the inline bailout (no pallas launch).
    out_bail = jax.block_until_ready(
        decode_var_forward(macro_var_param, micro_var_param, mu, z))
    assert jnp.allclose(out_bail, ref_small, atol=1e-5, rtol=1e-5)

    # 3) Multi-block ragged cdiv grid (forced small tiles): B=44 rows, Rt=8 -> 6 blocks,
    #    last block partial (4 valid rows). Exercises the clamped-write path.
    B2 = 44
    mu2 = jax.random.normal(k3, (B2, latent), dtype=jnp.float32)
    z2 = jax.random.normal(k4, (B2, latent), dtype=jnp.float32)
    out2 = jax.block_until_ready(
        decode_var_forward(macro_var_param, micro_var_param, mu2, z2,
                           force_pallas=True, max_lane_width=64,
                           block_budget_bytes=1024))
    ref2 = _reference(macro_var_param, micro_var_param, z2)
    assert out2.shape == (B2, C, X), out2.shape
    assert jnp.allclose(out2, ref2, atol=1e-5, rtol=1e-5), \
        float(jnp.max(jnp.abs(out2 - ref2)))

    print("KERNEL_OK")
</pallas_src>

<mosaic_0001>
module attributes {stable_mosaic.version = 11 : i64} {
  func.func @_decode_var_kernel(%arg0: i32, %arg1: memref<2x64xf32, #tpu.memory_space<vmem>>, %arg2: memref<1x128xf32, #tpu.memory_space<vmem>>) attributes {dimension_semantics = [#tpu.dimension_semantics<parallel>], iteration_bounds = array<i64: 1>, scalar_prefetch = 0 : i64, scratch_operands = 0 : i64, tpu.core_type = #tpu.core_type<tc>, window_params = [{pipeline_mode = #tpu.pipeline_mode<synchronous>, transform_indices = @transform_0, window_bounds = array<i64: 2, 64>}, {transform_indices = @transform_1, window_bounds = array<i64: 1, 128>}]} {
    %c0 = arith.constant 0 : index
    %c0_0 = arith.constant 0 : index
    %0 = vector.load %arg1[%c0, %c0_0] : memref<2x64xf32, #tpu.memory_space<vmem>>, vector<2x64xf32>
    %cst = arith.constant 2.000000e+01 : f32
    %1 = vector.broadcast %cst : f32 to vector<2x64xf32>
    %2 = arith.cmpf ogt, %0, %1 : vector<2x64xf32>
    %cst_1 = arith.constant 2.000000e+01 : f32
    %3 = vector.broadcast %cst_1 : f32 to vector<2x64xf32>
    %4 = arith.minimumf %0, %3 : vector<2x64xf32>
    %5 = math.exp %4 : vector<2x64xf32>
    %6 = math.log1p %5 : vector<2x64xf32>
    %7 = arith.select %2, %0, %6 : vector<2x64xi1>, vector<2x64xf32>
    %8 = vector.extract_strided_slice %7 {offsets = [0, 0], sizes = [1, 64], strides = [1, 1]} : vector<2x64xf32> to vector<1x64xf32>
    %9 = vector.extract_strided_slice %7 {offsets = [1, 0], sizes = [1, 64], strides = [1, 1]} : vector<2x64xf32> to vector<1x64xf32>
    %cst_2 = arith.constant 1.000000e+00 : f32
    %10 = vector.broadcast %cst_2 : f32 to vector<1x64xf32>
    %11 = arith.divf %10, %8 : vector<1x64xf32>
    %cst_3 = arith.constant 1.000000e+00 : f32
    %12 = vector.broadcast %cst_3 : f32 to vector<1x64xf32>
    %13 = arith.divf %12, %9 : vector<1x64xf32>
    %14 = arith.addf %11, %13 : vector<1x64xf32>
    %cst_4 = arith.constant 1.000000e+00 : f32
    %15 = vector.broadcast %cst_4 : f32 to vector<1x64xf32>
    %16 = arith.divf %15, %14 : vector<1x64xf32>
    %17 = tpu.concatenate %16, %16 in 1 : vector<1x64xf32>, vector<1x64xf32> -> vector<1x128xf32>
    %c0_5 = arith.constant 0 : index
    %c0_6 = arith.constant 0 : index
    %18 = vector.load %arg2[%c0_5, %c0_6] : memref<1x128xf32, #tpu.memory_space<vmem>>, vector<1x128xf32>
    tpu.vector_store %arg2[%c0_5, %c0_6], %17 {strides = array<i32>} : memref<1x128xf32, #tpu.memory_space<vmem>>, vector<1x128xf32>,
    return
  }
  func.func @transform_0(%arg0: i32) -> (i32, i32) {
    %c0_i32 = arith.constant 0 : i32
    %c0_i32_0 = arith.constant 0 : i32
    %c0_i32_1 = arith.constant 0 : i32
    return %c0_i32, %c0_i32_0 : i32, i32
  }
  func.func @transform_1(%arg0: i32) -> (i32, i32) {
    %c0_i32 = arith.constant 0 : i32
    %c0_i32_0 = arith.constant 0 : i32
    return %arg0, %c0_i32 : i32, i32
  }
}

</mosaic_0001>

<llo_original>
// kernel: tpu_custom_call.1
$region0: #{tpu_custom_call.1}
  #allocation0 [shape = 'u32[]', space=smem, size = 0x4, offset = 0x4, fixed_abs, tag = 'smem constant byte address 0x4 - core index']
  #allocation1 [shape = 'u32[144,128]{1,0:T(1,128)}', space=vmem, size = 0x12000, scoped, tag = 'internal scratch']
  %s0 = inlined_call_operand.hbm [shape: f32[2,64], index: 0, kind: input, shape index: {}]
  %s1 = inlined_call_operand.hbm [shape: f32[1,128], index: 1, kind: output, shape index: {}]
  %s2 = sld [smem:[#allocation0]]
  $region18: #{tpu_custom_call.1} parent=0
    _
  %s4 = ssub.s32 1, %s2
  %s5 = scalar_select 0, %s4, %s2
  $region1: #{tpu_custom_call.1} parent=0
    #allocation2 [shape = 'u8[1024]{0}', space=vmem, size = 0x400, scoped, tag = 'input window, operand 0, single buffered']
    #allocation3 [shape = 's32[1]{0}', space=sflag, size = 0x4, scoped, tag = 'scoped memory for tpu_custom_call.1']
    #allocation4 [shape = 's32[1]{0}', space=sflag, size = 0x4, scoped, tag = 'scoped memory for tpu_custom_call.1']
    #allocation5 [shape = 'u8[512]{0}', space=vmem, size = 0x400, scoped, tag = 'output window, operand 0, single buffered']
    %6 = vsyncpa [#allocation3], 0
    %7 = vsyncpa [#allocation4], 0
    // Predicated region
    $region2: #{tpu_custom_call.1} parent=1 // pred_check
      _
    $region3: #{tpu_custom_call.1} parent=1 // pred_check_branch
      %9 = sbr.rel (0) target = $region5
    $region4: #{tpu_custom_call.1} parent=1 // pred_region
      %s11 = ssub.s32 32, 32
      %12 = vsyncadd [#allocation3], %s11
      %s14 = sshll.u32 [#allocation2], 4
      %s15 = int_to_ptr.vmem [resolvable:$true] %s14
      %17 = dma.hbm_to_vmem [thread:$0]  %s0, 32, %s15, [#allocation3]
    $region5: #{tpu_custom_call.1} parent=1 // pred_fallthru
      _
    // Predicated region
    $region6: #{tpu_custom_call.1} parent=1 // pred_check
      _
    $region7: #{tpu_custom_call.1} parent=1 // pred_check_branch
      %19 = sbr.rel (0) target = $region9
    $region8: #{tpu_custom_call.1} parent=1 // pred_region
      %20 = dma.done [#allocation3], 32
    $region9: #{tpu_custom_call.1} parent=1 // pred_fallthru
      _
    %v21 = vld [vmem:[#allocation2] sm:$0x3]
    %vm22 = vcmp.gt.f32.partialorder %v21, 20.0
    %v23 = vmin.f32 %v21, 20.0
    %v24 = vmul.f32 %v23, 1.442695
    %v25 = vpow.pop %v24
    %v26 = vadd.f32 %v25, 1.0
    %v27 = vlog2.pop %v26
    %v28 = vmul.f32 %v27, 0.6931472
    %v29 = vmul.f32 -0.5, %v25
    %v30 = vadd.f32 %v29, 1.0
    %v31 = vmul.f32 %v30, %v25
    %v32 = vand.u32 2147483647, %v25
    %vm33 = vcmp.lt.f32.partialorder %v32, 0.0004427343
    %v34 = vsel %vm33, %v31, %v28
    %v35 = vsel %vm22, %v21, %v34
    %v36 = vrcp.pop %v35
    %v37 = vmul.f32 1.0, %v36
    %v39 = vrot.slane %v37, 1
    %v41 = vadd.f32 %v37, %v39
    %v42 = vrcp.pop %v41
    %v43 = vmul.f32 1.0, %v42
    %45 = vrot.lane.b32.xlu0 %v43, 64
    %v46 = vpop.permute.xlu0 %45
    %vm48 = vcmask 523264
    %v49 = vsel %vm48, %v43, %v46
    %50 = vst [vmem:[#allocation5] sm:$0x1] %v49
    // Predicated region
    $region10: #{tpu_custom_call.1} parent=1 // pred_check
      _
    $region11: #{tpu_custom_call.1} parent=1 // pred_check_branch
      %52 = sbr.rel (0) target = $region13
    $region12: #{tpu_custom_call.1} parent=1 // pred_region
      %s54 = ssub.s32 16, 16
      %55 = vsyncadd [#allocation4], %s54
      %s57 = sshll.u32 [#allocation5], 4
      %s58 = int_to_ptr.vmem [resolvable:$true] %s57
      %60 = dma.vmem_to_hbm [thread:$0]  %s58, 16, %s1, [#allocation4]
    $region13: #{tpu_custom_call.1} parent=1 // pred_fallthru
      _
    // Predicated region
    $region14: #{tpu_custom_call.1} parent=1 // pred_check
      _
    $region15: #{tpu_custom_call.1} parent=1 // pred_check_branch
      %62 = sbr.rel (0) target = $region17
    $region16: #{tpu_custom_call.1} parent=1 // pred_region
      %63 = dma.done [#allocation4], 16
    $region17: #{tpu_custom_call.1} parent=1 // pred_fallthru
      _
    %64 = vsyncpa [#allocation3], 1
    %65 = vsyncpa [#allocation4], 1

</llo_original>
